<compile_context>
chip_gen: v7x
topology: tpu7x:2x2x1
jax: 0.10.0
libtpu: 0.0.40
codegen_flags: <defaults>
</compile_context>

<pallas_src>
import jax
import jax.numpy as jnp
from jax.experimental import pallas as pl
from jax.experimental.pallas import tpu as pltpu


def _round_up(x, m):
    return ((x + m - 1) // m) * m


def _neuron_kernel(cx_ref, bx_ref, cw_ref, bw_ref, bias_ref, o_ref):
    """One batch tile: two small MXU dots + f32 bias/ReLU epilogue.

    cx_ref/bx_ref: [TB, D] activations (native dtype, straight from HBM).
    cw_ref/bw_ref: [D, 1] f32 weight columns (VMEM resident, read once).
    bias_ref:      [2]    f32 scalars in SMEM: (color_bias, brightness_bias).
    o_ref:         [TB, 2] output; column 0 = color, column 1 = brightness.
    """
    c = jnp.dot(cx_ref[...], cw_ref[...],
                preferred_element_type=jnp.float32,
                precision=jax.lax.Precision.HIGHEST)
    b = jnp.dot(bx_ref[...], bw_ref[...],
                preferred_element_type=jnp.float32,
                precision=jax.lax.Precision.HIGHEST)
    o_ref[:, 0:1] = jnp.maximum(c + bias_ref[0], 0.0).astype(o_ref.dtype)
    o_ref[:, 1:2] = jnp.maximum(b + bias_ref[1], 0.0).astype(o_ref.dtype)


def simple_multi_channel_neuron(color_inputs, brightness_inputs,
                                color_weights, brightness_weights,
                                color_bias, brightness_bias,
                                *, block_b=8192):
    """Pallas-backed forward pass. Returns (color_output, brightness_output),
    each of shape [batch] (matching torch.matmul([B, N], [N]) -> [B])."""
    B, D = color_inputs.shape
    assert brightness_inputs.shape == (B, D)

    # Activations are fed to the kernel in their native (promoted) dtype so
    # HBM bytes stay minimal; parameters stay f32 like the PyTorch module.
    act_dtype = jnp.promote_types(color_inputs.dtype, brightness_inputs.dtype)
    out_dtype = jnp.promote_types(act_dtype, jnp.float32)

    # Dtype-aware sublane alignment: (8,128) tiles for 32-bit, (16,128) for
    # 16-bit, (32,128) for 8-bit activations.
    sublane = {1: 32, 2: 16, 4: 8}.get(jnp.dtype(act_dtype).itemsize, 8)
    block_b = _round_up(max(block_b, sublane), sublane)

    cx = color_inputs.astype(act_dtype)
    bx = brightness_inputs.astype(act_dtype)
    cw = color_weights.astype(jnp.float32).reshape(D, 1)
    bw = brightness_weights.astype(jnp.float32).reshape(D, 1)
    bias = jnp.concatenate([color_bias.reshape(-1).astype(jnp.float32),
                            brightness_bias.reshape(-1).astype(jnp.float32)])

    # Batch tiling: big tiles to amortize the ~0.35 us per-grid-step overhead,
    # but capped at ~half the batch (sublane-aligned) so v7x's two TensorCores
    # both get work when B is moderate.  Pallas clips the partial final block.
    if B < 2 * sublane:
        tb = B                                   # single full-extent block
    else:
        tb = min(block_b, _round_up(pl.cdiv(B, 2), sublane))
    grid = (pl.cdiv(B, tb),)

    out = pl.pallas_call(
        _neuron_kernel,
        out_shape=jax.ShapeDtypeStruct((B, 2), out_dtype),
        grid=grid,
        in_specs=[
            pl.BlockSpec((tb, D), lambda i: (i, 0)),   # color activations
            pl.BlockSpec((tb, D), lambda i: (i, 0)),   # brightness activations
            pl.BlockSpec((D, 1), lambda i: (0, 0)),    # color weights (resident)
            pl.BlockSpec((D, 1), lambda i: (0, 0)),    # brightness weights
            pl.BlockSpec(memory_space=pltpu.MemorySpace.SMEM),  # (2,) biases
        ],
        out_specs=pl.BlockSpec((tb, 2), lambda i: (i, 0)),
        compiler_params=pltpu.CompilerParams(
            dimension_semantics=("parallel",)),        # v7x: shard batch over 2 TCs
    )(cx, bx, cw, bw, bias)

    # Combined (B, 2) -> two [B] channel vectors (cheap wrapper slice).
    return out[:, 0], out[:, 1]


if __name__ == "__main__":
    # Small shapes consistent with the module: batch=8, input_size=32.
    batch, input_size = 8, 32

    key = jax.random.PRNGKey(0)
    k_cw, k_bw, k_cx, k_bx, k_cx2, k_bx2, k_cx3, k_bx3 = jax.random.split(key, 8)

    # Parameters (module-style init; nonzero biases to exercise the bias add).
    color_weights = jax.random.normal(k_cw, (input_size,), jnp.float32) * 0.01
    brightness_weights = jax.random.normal(k_bw, (input_size,), jnp.float32) * 0.01
    color_bias = jnp.full((1,), 0.02, jnp.float32)
    brightness_bias = jnp.full((1,), -0.03, jnp.float32)

    def reference(cxi, bxi):
        c = jnp.maximum(
            jnp.einsum("bd,d->b", cxi, color_weights,
                       precision=jax.lax.Precision.HIGHEST) + color_bias, 0.0)
        b = jnp.maximum(
            jnp.einsum("bd,d->b", bxi, brightness_weights,
                       precision=jax.lax.Precision.HIGHEST) + brightness_bias, 0.0)
        return c, b

    # 1) Small batch (single grid step, full-extent block).
    cx = jax.random.normal(k_cx, (batch, input_size), jnp.float32)
    bx = jax.random.normal(k_bx, (batch, input_size), jnp.float32)
    c_out, b_out = simple_multi_channel_neuron(
        cx, bx, color_weights, brightness_weights, color_bias, brightness_bias)
    jax.block_until_ready((c_out, b_out))
    ref_c, ref_b = reference(cx, bx)
    assert c_out.shape == (batch,) and b_out.shape == (batch,)
    assert jnp.allclose(c_out, ref_c, atol=1e-4)
    assert jnp.allclose(b_out, ref_b, atol=1e-4)

    # 2) Larger batch exercising the 2-step, pipelined, megacore-shardable grid.
    big = 2048
    cx2 = jax.random.normal(k_cx2, (big, input_size), jnp.float32)
    bx2 = jax.random.normal(k_bx2, (big, input_size), jnp.float32)
    c2, b2 = simple_multi_channel_neuron(
        cx2, bx2, color_weights, brightness_weights, color_bias, brightness_bias)
    jax.block_until_ready((c2, b2))
    ref_c2, ref_b2 = reference(cx2, bx2)
    assert jnp.allclose(c2, ref_c2, atol=1e-4)
    assert jnp.allclose(b2, ref_b2, atol=1e-4)

    # 3) Ragged batch (not a multiple of the tile) exercising partial-block clipping.
    odd = 1000
    cx3 = jax.random.normal(k_cx3, (odd, input_size), jnp.float32)
    bx3 = jax.random.normal(k_bx3, (odd, input_size), jnp.float32)
    c3, b3 = simple_multi_channel_neuron(
        cx3, bx3, color_weights, brightness_weights, color_bias, brightness_bias)
    jax.block_until_ready((c3, b3))
    ref_c3, ref_b3 = reference(cx3, bx3)
    assert c3.shape == (odd,) and b3.shape == (odd,)
    assert jnp.allclose(c3, ref_c3, atol=1e-4)
    assert jnp.allclose(b3, ref_b3, atol=1e-4)

    # TODO(synk): the module's print() logging in forward() is host-side debug
    # output and is intentionally not replicated in the kernel.
    print("KERNEL_OK")
</pallas_src>

<mosaic_0001>
module attributes {stable_mosaic.version = 11 : i64} {
  func.func @_neuron_kernel(%arg0: i32, %arg1: memref<8x32xf32, #tpu.memory_space<vmem>>, %arg2: memref<8x32xf32, #tpu.memory_space<vmem>>, %arg3: memref<32x1xf32, #tpu.memory_space<vmem>>, %arg4: memref<32x1xf32, #tpu.memory_space<vmem>>, %arg5: memref<2xf32, #tpu.memory_space<smem>>, %arg6: memref<8x2xf32, #tpu.memory_space<vmem>>) attributes {dimension_semantics = [#tpu.dimension_semantics<parallel>], iteration_bounds = array<i64: 1>, scalar_prefetch = 0 : i64, scratch_operands = 0 : i64, tpu.core_type = #tpu.core_type<tc>, window_params = [{transform_indices = @transform_0, window_bounds = array<i64: 8, 32>}, {transform_indices = @transform_1, window_bounds = array<i64: 8, 32>}, {pipeline_mode = #tpu.pipeline_mode<synchronous>, transform_indices = @transform_2, window_bounds = array<i64: 32, 1>}, {pipeline_mode = #tpu.pipeline_mode<synchronous>, transform_indices = @transform_3, window_bounds = array<i64: 32, 1>}, {transform_indices = @transform_4, window_bounds = array<i64: 2>}, {transform_indices = @transform_5, window_bounds = array<i64: 8, 2>}]} {
    %c0 = arith.constant 0 : index
    %c0_0 = arith.constant 0 : index
    %0 = vector.load %arg1[%c0, %c0_0] : memref<8x32xf32, #tpu.memory_space<vmem>>, vector<8x32xf32>
    %c0_1 = arith.constant 0 : index
    %c0_2 = arith.constant 0 : index
    %1 = vector.load %arg3[%c0_1, %c0_2] : memref<32x1xf32, #tpu.memory_space<vmem>>, vector<32x1xf32>
    %cst = arith.constant dense<0.000000e+00> : vector<8x1xf32>
    %2 = tpu.matmul %0, %1, %cst {dimension_numbers = #tpu.dot_dimension_numbers<[1], [0], [0], [1], [0, 0, 1, 1], [], []>, precision = #tpu.contract_precision<fp32>} : vector<8x32xf32>, vector<32x1xf32>, vector<8x1xf32> -> vector<8x1xf32>
    %c0_3 = arith.constant 0 : index
    %c0_4 = arith.constant 0 : index
    %3 = vector.load %arg2[%c0_3, %c0_4] : memref<8x32xf32, #tpu.memory_space<vmem>>, vector<8x32xf32>
    %c0_5 = arith.constant 0 : index
    %c0_6 = arith.constant 0 : index
    %4 = vector.load %arg4[%c0_5, %c0_6] : memref<32x1xf32, #tpu.memory_space<vmem>>, vector<32x1xf32>
    %cst_7 = arith.constant dense<0.000000e+00> : vector<8x1xf32>
    %5 = tpu.matmul %3, %4, %cst_7 {dimension_numbers = #tpu.dot_dimension_numbers<[1], [0], [0], [1], [0, 0, 1, 1], [], []>, precision = #tpu.contract_precision<fp32>} : vector<8x32xf32>, vector<32x1xf32>, vector<8x1xf32> -> vector<8x1xf32>
    %c0_8 = arith.constant 0 : index
    %6 = memref.load %arg5[%c0_8] : memref<2xf32, #tpu.memory_space<smem>>
    %7 = vector.broadcast %6 : f32 to vector<8x1xf32>
    %8 = arith.addf %2, %7 : vector<8x1xf32>
    %cst_9 = arith.constant 0.000000e+00 : f32
    %9 = vector.broadcast %cst_9 : f32 to vector<8x1xf32>
    %10 = arith.maximumf %8, %9 : vector<8x1xf32>
    %c0_10 = arith.constant 0 : index
    %c0_11 = arith.constant 0 : index
    %11 = vector.load %arg6[%c0_10, %c0_11] : memref<8x2xf32, #tpu.memory_space<vmem>>, vector<8x1xf32>
    tpu.vector_store %arg6[%c0_10, %c0_11], %10 {strides = array<i32>} : memref<8x2xf32, #tpu.memory_space<vmem>>, vector<8x1xf32>,
    %c1 = arith.constant 1 : index
    %12 = memref.load %arg5[%c1] : memref<2xf32, #tpu.memory_space<smem>>
    %13 = vector.broadcast %12 : f32 to vector<8x1xf32>
    %14 = arith.addf %5, %13 : vector<8x1xf32>
    %cst_12 = arith.constant 0.000000e+00 : f32
    %15 = vector.broadcast %cst_12 : f32 to vector<8x1xf32>
    %16 = arith.maximumf %14, %15 : vector<8x1xf32>
    %c0_13 = arith.constant 0 : index
    %c1_14 = arith.constant 1 : index
    %17 = vector.load %arg6[%c0_13, %c1_14] : memref<8x2xf32, #tpu.memory_space<vmem>>, vector<8x1xf32>
    tpu.vector_store %arg6[%c0_13, %c1_14], %16 {strides = array<i32>} : memref<8x2xf32, #tpu.memory_space<vmem>>, vector<8x1xf32>,
    return
  }
  func.func @transform_0(%arg0: i32) -> (i32, i32) {
    %c0_i32 = arith.constant 0 : i32
    %c0_i32_0 = arith.constant 0 : i32
    return %arg0, %c0_i32 : i32, i32
  }
  func.func @transform_1(%arg0: i32) -> (i32, i32) {
    %c0_i32 = arith.constant 0 : i32
    %c0_i32_0 = arith.constant 0 : i32
    return %arg0, %c0_i32 : i32, i32
  }
  func.func @transform_2(%arg0: i32) -> (i32, i32) {
    %c0_i32 = arith.constant 0 : i32
    %c0_i32_0 = arith.constant 0 : i32
    %c0_i32_1 = arith.constant 0 : i32
    return %c0_i32, %c0_i32_0 : i32, i32
  }
  func.func @transform_3(%arg0: i32) -> (i32, i32) {
    %c0_i32 = arith.constant 0 : i32
    %c0_i32_0 = arith.constant 0 : i32
    %c0_i32_1 = arith.constant 0 : i32
    return %c0_i32, %c0_i32_0 : i32, i32
  }
  func.func @transform_4(%arg0: i32) -> i32 {
    %c0_i32 = arith.constant 0 : i32
    %c0_i32_0 = arith.constant 0 : i32
    return %c0_i32 : i32
  }
  func.func @transform_5(%arg0: i32) -> (i32, i32) {
    %c0_i32 = arith.constant 0 : i32
    %c0_i32_0 = arith.constant 0 : i32
    return %arg0, %c0_i32 : i32, i32
  }
}

</mosaic_0001>

<llo_original>
// kernel: tpu_custom_call.1
$region0: #{tpu_custom_call.1}
  #allocation0 [shape = 'u32[]', space=smem, size = 0x4, offset = 0x4, fixed_abs, tag = 'smem constant byte address 0x4 - core index']
  #allocation1 [shape = 'u32[144,128]{1,0:T(1,128)}', space=vmem, size = 0x12000, scoped, tag = 'internal scratch']
  %s0 = inlined_call_operand.vmem [shape: f32[8,32], index: 0, kind: input, shape index: {}]
  %s1 = inlined_call_operand.vmem [shape: f32[8,32], index: 1, kind: input, shape index: {}]
  %s2 = inlined_call_operand.vmem [shape: f32[32,1], index: 2, kind: input, shape index: {}]
  %s3 = inlined_call_operand.vmem [shape: f32[32,1], index: 3, kind: input, shape index: {}]
  %s4 = inlined_call_operand.vmem [shape: f32[2], index: 4, kind: input, shape index: {}]
  %s5 = inlined_call_operand.vmem [shape: f32[8,2], index: 5, kind: output, shape index: {}]
  %s6 = sld [smem:[#allocation0]]
  $region34: #{tpu_custom_call.1} parent=0
    _
  %s8 = ssub.s32 1, %s6
  %s9 = scalar_select 0, %s8, %s6
  $region1: #{tpu_custom_call.1} parent=0
    #allocation2 [shape = 'u8[512]{0}', space=smem, size = 0x200, scoped, tag = 'input window, operand 4, single buffered']
    #allocation3 [shape = 's32[1]{0}', space=sflag, size = 0x4, scoped, tag = 'scoped memory for tpu_custom_call.1']
    %10 = vsyncpa [#allocation3], 0
    // Predicated region
    $region2: #{tpu_custom_call.1} parent=1 // pred_check
      _
    $region3: #{tpu_custom_call.1} parent=1 // pred_check_branch
      %12 = sbr.rel (0) target = $region5
    $region4: #{tpu_custom_call.1} parent=1 // pred_region
      _
    $region5: #{tpu_custom_call.1} parent=1 // pred_fallthru
      _
    // Predicated region
    $region6: #{tpu_custom_call.1} parent=1 // pred_check
      _
    $region7: #{tpu_custom_call.1} parent=1 // pred_check_branch
      %14 = sbr.rel (0) target = $region9
    $region8: #{tpu_custom_call.1} parent=1 // pred_region
      _
    $region9: #{tpu_custom_call.1} parent=1 // pred_fallthru
      _
    // Predicated region
    $region10: #{tpu_custom_call.1} parent=1 // pred_check
      _
    $region11: #{tpu_custom_call.1} parent=1 // pred_check_branch
      %16 = sbr.rel (0) target = $region13
    $region12: #{tpu_custom_call.1} parent=1 // pred_region
      _
    $region13: #{tpu_custom_call.1} parent=1 // pred_fallthru
      _
    // Predicated region
    $region14: #{tpu_custom_call.1} parent=1 // pred_check
      _
    $region15: #{tpu_custom_call.1} parent=1 // pred_check_branch
      %18 = sbr.rel (0) target = $region17
    $region16: #{tpu_custom_call.1} parent=1 // pred_region
      _
    $region17: #{tpu_custom_call.1} parent=1 // pred_fallthru
      _
    // Predicated region
    $region18: #{tpu_custom_call.1} parent=1 // pred_check
      _
    $region19: #{tpu_custom_call.1} parent=1 // pred_check_branch
      %20 = sbr.rel (0) target = $region21
    $region20: #{tpu_custom_call.1} parent=1 // pred_region
      %s22 = ssub.s32 16, 16
      %23 = vsyncadd [#allocation3], %s22
      %s25 = sshll.u32 %s4, 4
      %s26 = int_to_ptr.vmem [resolvable:$true] %s25
      %28 = dma.vmem_to_smem %s26, 16, [#allocation2], [#allocation3]
    $region21: #{tpu_custom_call.1} parent=1 // pred_fallthru
      _
    // Predicated region
    $region22: #{tpu_custom_call.1} parent=1 // pred_check
      _
    $region23: #{tpu_custom_call.1} parent=1 // pred_check_branch
      %30 = sbr.rel (0) target = $region25
    $region24: #{tpu_custom_call.1} parent=1 // pred_region
      %31 = dma.done [#allocation3], 16
    $region25: #{tpu_custom_call.1} parent=1 // pred_fallthru
      _
    %32 = sfence
    %v33 = vld [vmem:[%s0] sm:$0xff]
    %v34 = vld [vmem:[%s2] sm:$0xff]
    %v35 = vld [vmem:[%s2 + $0x8] sm:$0xff]
    %v36 = vld [vmem:[%s2 + $0x10] sm:$0xff]
    %v37 = vld [vmem:[%s2 + $0x18] sm:$0xff]
    %v38 = vld [vmem:[%s1] sm:$0xff]
    %v39 = vld [vmem:[%s3] sm:$0xff]
    %v40 = vld [vmem:[%s3 + $0x8] sm:$0xff]
    %v41 = vld [vmem:[%s3 + $0x10] sm:$0xff]
    %v42 = vld [vmem:[%s3 + $0x18] sm:$0xff]
    %s43 = sld [smem:[#allocation2]]
    %v44 = vstv %s43
    %vm45 = vcmask 261120
    %v47 = vsel %vm45, %v33, 0
    %49 = vmatprep.subr.mxu0 0.0
    %v50 = vand.u32 %v34, 4294901760
    %51 = vmatpush1.msra.mxu0 %v50
    %52 = vmatprep.subr.mxu0 0.0
    %v53 = vand.u32 %v35, 4294901760
    %54 = vmatpush1.msra.mxu0 %v53
    %55 = vmatprep.subr.mxu0 0.0
    %v56 = vand.u32 %v36, 4294901760
    %57 = vmatpush1.msra.mxu0 %v56
    %58 = vmatprep.subr.mxu0 0.0
    %v59 = vand.u32 %v37, 4294901760
    %60 = vmatpush1.msra.mxu0 %v59
    %61 = vmatprep.subr.mxu0 0.0
    %62 = vmatpush1.msra.mxu0 0.0
    %63 = vmatprep.subr.mxu0 0.0
    %64 = vmatpush1.msra.mxu0 0.0
    %65 = vmatprep.subr.mxu0 0.0
    %66 = vmatpush1.msra.mxu0 0.0
    %67 = vmatprep.subr.mxu0 0.0
    %68 = vmatpush1.msra.mxu0 0.0
    %69 = vmatprep.subr.mxu0 0.0
    %70 = vmatpush1.msra.mxu0 0.0
    %71 = vmatprep.subr.mxu0 0.0
    %72 = vmatpush1.msra.mxu0 0.0
    %73 = vmatprep.subr.mxu0 0.0
    %74 = vmatpush1.msra.mxu0 0.0
    %75 = vmatprep.subr.mxu0 0.0
    %76 = vmatpush1.msra.mxu0 0.0
    %77 = vmatprep.subr.mxu0 0.0
    %78 = vmatpush1.msra.mxu0 0.0
    %79 = vmatprep.subr.mxu0 0.0
    %80 = vmatpush1.msra.mxu0 0.0
    %81 = vmatprep.subr.mxu0 0.0
    %82 = vmatpush1.msra.mxu0 0.0
    %83 = vmatprep.subr.mxu0 0.0
    %84 = vmatpush1.msra.mxu0 0.0
    %85 = vmatprep.subr.mxu0 0.0
    %86 = vmatpush1.msra.mxu0 0.0
    %87 = vmatprep.subr.mxu0 0.0
    %88 = vmatpush1.msra.mxu0 0.0
    %89 = vmatprep.subr.mxu0 0.0
    %90 = vmatpush1.msra.mxu0 0.0
    %91 = vmatprep.subr.mxu0 0.0
    %92 = vmatpush1.msra.mxu0 0.0
    %93 = vmatprep.subr.mxu0 0.0
    %94 = vmatpush1.msra.mxu0 0.0
    %95 = vmatprep.subr.mxu0 0.0
    %96 = vmatpush1.msra.mxu0 0.0
    %97 = vmatprep.subr.mxu0 0.0
    %98 = vmatpush1.msra.mxu0 0.0
    %99 = vmatprep.subr.mxu0 0.0
    %100 = vmatpush1.msra.mxu0 0.0
    %101 = vmatprep.subr.mxu0 0.0
    %102 = vmatpush1.msra.mxu0 0.0
    %103 = vmatprep.subr.mxu0 0.0
    %104 = vmatpush1.msra.mxu0 0.0
    %105 = vmatprep.subr.mxu0 0.0
    %106 = vmatpush1.msra.mxu0 0.0
    %107 = vmatprep.subr.mxu0 0.0
    %108 = vmatpush1.msra.mxu0 0.0
    %109 = vmatprep.subr.mxu0 0.0
    %110 = vmatpush1.msra.mxu0 0.0
    %111 = vmatprep.subr.mxu0 0.0
    %112 = vmatpush1.msra.mxu0 0.0
    %113 = vmatprep.subr.mxu0 0.0
    %114 = vmatpush1.msra.mxu0 0.0
    %115 = vmatprep.subr.mxu0 0.0
    %116 = vmatpush1.msra.mxu0 0.0
    %117 = vmatprep.mubr.f32.mxu0 0.0
    %v118 = vand.u32 %v47, 4294901760
    %v119 = vsub.f32 %v47, %v118
    %v120 = vand.u32 %v119, 4294901760
    %v121 = vsub.f32 %v119, %v120
    %v122 = vand.u32 %v121, 4294901760
    %123 = vmatmul.mubr.f32.gmra.mrb[0].mxu0 %v122
    %v124 = vpop.f32.mrb[0].mxu0
    %v125 = vadd.f32 %v44, %v124
    %v126 = vpop.f32.mrb[0].mxu0
    %127 = vdwg.mxu0
    %128 = vmatprep.subr.mxu0 0.0
    %v129 = vand.u32 %v34, 4294901760
    %v130 = vsub.f32 %v34, %v129
    %v131 = vand.u32 %v130, 4294901760
    %v132 = vsub.f32 %v130, %v131
    %v133 = vand.u32 %v132, 4294901760
    %134 = vmatpush1.msra.mxu0 %v133
    %135 = vmatprep.subr.mxu0 0.0
    %v136 = vand.u32 %v35, 4294901760
    %v137 = vsub.f32 %v35, %v136
    %v138 = vand.u32 %v137, 4294901760
    %v139 = vsub.f32 %v137, %v138
    %v140 = vand.u32 %v139, 4294901760
    %141 = vmatpush1.msra.mxu0 %v140
    %142 = vmatprep.subr.mxu0 0.0
    %v143 = vand.u32 %v36, 4294901760
    %v144 = vsub.f32 %v36, %v143
    %v145 = vand.u32 %v144, 4294901760
    %v146 = vsub.f32 %v144, %v145
    %v147 = vand.u32 %v146, 4294901760
    %148 = vmatpush1.msra.mxu0 %v147
    %149 = vmatprep.subr.mxu0 0.0
    %v150 = vand.u32 %v37, 4294901760
    %v151 = vsub.f32 %v37, %v150
    %v152 = vand.u32 %v151, 4294901760
    %v153 = vsub.f32 %v151, %v152
    %v154 = vand.u32 %v153, 4294901760
    %155 = vmatpush1.msra.mxu0 %v154
    %156 = vmatprep.subr.mxu0 0.0
    %157 = vmatpush1.msra.mxu0 0.0
    %158 = vmatprep.subr.mxu0 0.0
    %159 = vmatpush1.msra.mxu0 0.0
    %160 = vmatprep.subr.mxu0 0.0
    %161 = vmatpush1.msra.mxu0 0.0
    %162 = vmatprep.subr.mxu0 0.0
    %163 = vmatpush1.msra.mxu0 0.0
    %164 = vmatprep.subr.mxu0 0.0
    %165 = vmatpush1.msra.mxu0 0.0
    %166 = vmatprep.subr.mxu0 0.0
    %167 = vmatpush1.msra.mxu0 0.0
    %168 = vmatprep.subr.mxu0 0.0
    %169 = vmatpush1.msra.mxu0 0.0
    %170 = vmatprep.subr.mxu0 0.0
    %171 = vmatpush1.msra.mxu0 0.0
    %172 = vmatprep.subr.mxu0 0.0
    %173 = vmatpush1.msra.mxu0 0.0
    %174 = vmatprep.subr.mxu0 0.0
    %175 = vmatpush1.msra.mxu0 0.0
    %176 = vmatprep.subr.mxu0 0.0
    %177 = vmatpush1.msra.mxu0 0.0
    %178 = vmatprep.subr.mxu0 0.0
    %179 = vmatpush1.msra.mxu0 0.0
    %180 = vmatprep.subr.mxu0 0.0
    %181 = vmatpush1.msra.mxu0 0.0
    %182 = vmatprep.subr.mxu0 0.0
    %183 = vmatpush1.msra.mxu0 0.0
    %184 = vmatprep.subr.mxu0 0.0
    %185 = vmatpush1.msra.mxu0 0.0
    %186 = vmatprep.subr.mxu0 0.0
    %187 = vmatpush1.msra.mxu0 0.0
    %188 = vmatprep.subr.mxu0 0.0
    %189 = vmatpush1.msra.mxu0 0.0
    %190 = vmatprep.subr.mxu0 0.0
    %191 = vmatpush1.msra.mxu0 0.0
    %192 = vmatprep.subr.mxu0 0.0
    %193 = vmatpush1.msra.mxu0 0.0
    %194 = vmatprep.subr.mxu0 0.0
    %195 = vmatpush1.msra.mxu0 0.0
    %196 = vmatprep.subr.mxu0 0.0
    %197 = vmatpush1.msra.mxu0 0.0
    %198 = vmatprep.subr.mxu0 0.0
    %199 = vmatpush1.msra.mxu0 0.0
    %200 = vmatprep.subr.mxu0 0.0
    %201 = vmatpush1.msra.mxu0 0.0
    %202 = vmatprep.subr.mxu0 0.0
    %203 = vmatpush1.msra.mxu0 0.0
    %204 = vmatprep.subr.mxu0 0.0
    %205 = vmatpush1.msra.mxu0 0.0
    %206 = vmatprep.subr.mxu0 0.0
    %207 = vmatpush1.msra.mxu0 0.0
    %208 = vmatprep.subr.mxu0 0.0
    %209 = vmatpush1.msra.mxu0 0.0
    %210 = vmatprep.subr.mxu0 0.0
    %211 = vmatpush1.msra.mxu0 0.0
    %212 = vmatprep.mubr.f32.mxu0 0.0
    %v213 = vand.u32 %v47, 4294901760
    %214 = vmatmul.mubr.f32.gmra.mrb[0].mxu0 %v213
    %v215 = vpop.f32.mrb[0].mxu0
    %v216 = vadd.f32 %v125, %v215
    %v217 = vpop.f32.mrb[0].mxu0
    %218 = vdwg.mxu0
    %219 = vmatprep.subr.mxu0 0.0
    %v220 = vand.u32 %v34, 4294901760
    %v221 = vsub.f32 %v34, %v220
    %222 = vmatpush1.msra.mxu0 %v221
    %223 = vmatprep.subr.mxu0 0.0
    %v224 = vand.u32 %v35, 4294901760
    %v225 = vsub.f32 %v35, %v224
    %226 = vmatpush1.msra.mxu0 %v225
    %227 = vmatprep.subr.mxu0 0.0
    %v228 = vand.u32 %v36, 4294901760
    %v229 = vsub.f32 %v36, %v228
    %230 = vmatpush1.msra.mxu0 %v229
    %231 = vmatprep.subr.mxu0 0.0
    %v232 = vand.u32 %v37, 4294901760
    %v233 = vsub.f32 %v37, %v232
    %234 = vmatpush1.msra.mxu0 %v233
    %235 = vmatprep.subr.mxu0 0.0
    %236 = vmatpush1.msra.mxu0 0.0
    %237 = vmatprep.subr.mxu0 0.0
    %238 = vmatpush1.msra.mxu0 0.0
    %239 = vmatprep.subr.mxu0 0.0
    %240 = vmatpush1.msra.mxu0 0.0
    %241 = vmatprep.subr.mxu0 0.0
    %242 = vmatpush1.msra.mxu0 0.0
    %243 = vmatprep.subr.mxu0 0.0
    %244 = vmatpush1.msra.mxu0 0.0
    %245 = vmatprep.subr.mxu0 0.0
    %246 = vmatpush1.msra.mxu0 0.0
    %247 = vmatprep.subr.mxu0 0.0
    %248 = vmatpush1.msra.mxu0 0.0
    %249 = vmatprep.subr.mxu0 0.0
    %250 = vmatpush1.msra.mxu0 0.0
    %251 = vmatprep.subr.mxu0 0.0
    %252 = vmatpush1.msra.mxu0 0.0
    %253 = vmatprep.subr.mxu0 0.0
    %254 = vmatpush1.msra.mxu0 0.0
    %255 = vmatprep.subr.mxu0 0.0
    %256 = vmatpush1.msra.mxu0 0.0
    %257 = vmatprep.subr.mxu0 0.0
    %258 = vmatpush1.msra.mxu0 0.0
    %259 = vmatprep.subr.mxu0 0.0
    %260 = vmatpush1.msra.mxu0 0.0
    %261 = vmatprep.subr.mxu0 0.0
    %262 = vmatpush1.msra.mxu0 0.0
    %263 = vmatprep.subr.mxu0 0.0
    %264 = vmatpush1.msra.mxu0 0.0
    %265 = vmatprep.subr.mxu0 0.0
    %266 = vmatpush1.msra.mxu0 0.0
    %267 = vmatprep.subr.mxu0 0.0
    %268 = vmatpush1.msra.mxu0 0.0
    %269 = vmatprep.subr.mxu0 0.0
    %270 = vmatpush1.msra.mxu0 0.0
    %271 = vmatprep.subr.mxu0 0.0
    %272 = vmatpush1.msra.mxu0 0.0
    %273 = vmatprep.subr.mxu0 0.0
    %274 = vmatpush1.msra.mxu0 0.0
    %275 = vmatprep.subr.mxu0 0.0
    %276 = vmatpush1.msra.mxu0 0.0
    %277 = vmatprep.subr.mxu0 0.0
    %278 = vmatpush1.msra.mxu0 0.0
    %279 = vmatprep.subr.mxu0 0.0
    %280 = vmatpush1.msra.mxu0 0.0
    %281 = vmatprep.subr.mxu0 0.0
    %282 = vmatpush1.msra.mxu0 0.0
    %283 = vmatprep.subr.mxu0 0.0
    %284 = vmatpush1.msra.mxu0 0.0
    %285 = vmatprep.subr.mxu0 0.0
    %286 = vmatpush1.msra.mxu0 0.0
    %287 = vmatprep.subr.mxu0 0.0
    %288 = vmatpush1.msra.mxu0 0.0
    %289 = vmatprep.subr.mxu0 0.0
    %290 = vmatpush1.msra.mxu0 0.0
    %291 = vmatprep.mubr.f32.mxu0 0.0
    %v292 = vand.u32 %v47, 4294901760
    %v293 = vsub.f32 %v47, %v292
    %294 = vmatmul.mubr.f32.gmra.mrb[0].mxu0 %v293
    %v295 = vpop.f32.mrb[0].mxu0
    %v296 = vadd.f32 %v216, %v295
    %v297 = vpop.f32.mrb[0].mxu0
    %298 = vdwg.mxu0
    %299 = vmatprep.subr.mxu0 0.0
    %v300 = vand.u32 %v34, 4294901760
    %301 = vmatpush1.msra.mxu0 %v300
    %302 = vmatprep.subr.mxu0 0.0
    %v303 = vand.u32 %v35, 4294901760
    %304 = vmatpush1.msra.mxu0 %v303
    %305 = vmatprep.subr.mxu0 0.0
    %v306 = vand.u32 %v36, 4294901760
    %307 = vmatpush1.msra.mxu0 %v306
    %308 = vmatprep.subr.mxu0 0.0
    %v309 = vand.u32 %v37, 4294901760
    %310 = vmatpush1.msra.mxu0 %v309
    %311 = vmatprep.subr.mxu0 0.0
    %312 = vmatpush1.msra.mxu0 0.0
    %313 = vmatprep.subr.mxu0 0.0
    %314 = vmatpush1.msra.mxu0 0.0
    %315 = vmatprep.subr.mxu0 0.0
    %316 = vmatpush1.msra.mxu0 0.0
    %317 = vmatprep.subr.mxu0 0.0
    %318 = vmatpush1.msra.mxu0 0.0
    %319 = vmatprep.subr.mxu0 0.0
    %320 = vmatpush1.msra.mxu0 0.0
    %321 = vmatprep.subr.mxu0 0.0
    %322 = vmatpush1.msra.mxu0 0.0
    %323 = vmatprep.subr.mxu0 0.0
    %324 = vmatpush1.msra.mxu0 0.0
    %325 = vmatprep.subr.mxu0 0.0
    %326 = vmatpush1.msra.mxu0 0.0
    %327 = vmatprep.subr.mxu0 0.0
    %328 = vmatpush1.msra.mxu0 0.0
    %329 = vmatprep.subr.mxu0 0.0
    %330 = vmatpush1.msra.mxu0 0.0
    %331 = vmatprep.subr.mxu0 0.0
    %332 = vmatpush1.msra.mxu0 0.0
    %333 = vmatprep.subr.mxu0 0.0
    %334 = vmatpush1.msra.mxu0 0.0
    %335 = vmatprep.subr.mxu0 0.0
    %336 = vmatpush1.msra.mxu0 0.0
    %337 = vmatprep.subr.mxu0 0.0
    %338 = vmatpush1.msra.mxu0 0.0
    %339 = vmatprep.subr.mxu0 0.0
    %340 = vmatpush1.msra.mxu0 0.0
    %341 = vmatprep.subr.mxu0 0.0
    %342 = vmatpush1.msra.mxu0 0.0
    %343 = vmatprep.subr.mxu0 0.0
    %344 = vmatpush1.msra.mxu0 0.0
    %345 = vmatprep.subr.mxu0 0.0
    %346 = vmatpush1.msra.mxu0 0.0
    %347 = vmatprep.subr.mxu0 0.0
    %348 = vmatpush1.msra.mxu0 0.0
    %349 = vmatprep.subr.mxu0 0.0
    %350 = vmatpush1.msra.mxu0 0.0
    %351 = vmatprep.subr.mxu0 0.0
    %352 = vmatpush1.msra.mxu0 0.0
    %353 = vmatprep.subr.mxu0 0.0
    %354 = vmatpush1.msra.mxu0 0.0
    %355 = vmatprep.subr.mxu0 0.0
    %356 = vmatpush1.msra.mxu0 0.0
    %357 = vmatprep.subr.mxu0 0.0
    %358 = vmatpush1.msra.mxu0 0.0
    %359 = vmatprep.subr.mxu0 0.0
    %360 = vmatpush1.msra.mxu0 0.0
    %361 = vmatprep.subr.mxu0 0.0
    %362 = vmatpush1.msra.mxu0 0.0
    %363 = vmatprep.subr.mxu0 0.0
    %364 = vmatpush1.msra.mxu0 0.0
    %365 = vmatprep.subr.mxu0 0.0
    %366 = vmatpush1.msra.mxu0 0.0
    %367 = vmatprep.mubr.f32.mxu0 0.0
    %v368 = vand.u32 %v47, 4294901760
    %v369 = vsub.f32 %v47, %v368
    %v370 = vand.u32 %v369, 4294901760
    %371 = vmatmul.mubr.f32.gmra.mrb[0].mxu0 %v370
    %v372 = vpop.f32.mrb[0].mxu0
    %v373 = vadd.f32 %v296, %v372
    %v374 = vpop.f32.mrb[0].mxu0
    %375 = vdwg.mxu0
    %376 = vmatprep.subr.mxu0 0.0
    %v377 = vand.u32 %v34, 4294901760
    %v378 = vsub.f32 %v34, %v377
    %v379 = vand.u32 %v378, 4294901760
    %380 = vmatpush1.msra.mxu0 %v379
    %381 = vmatprep.subr.mxu0 0.0
    %v382 = vand.u32 %v35, 4294901760
    %v383 = vsub.f32 %v35, %v382
    %v384 = vand.u32 %v383, 4294901760
    %385 = vmatpush1.msra.mxu0 %v384
    %386 = vmatprep.subr.mxu0 0.0
    %v387 = vand.u32 %v36, 4294901760
    %v388 = vsub.f32 %v36, %v387
    %v389 = vand.u32 %v388, 4294901760
    %390 = vmatpush1.msra.mxu0 %v389
    %391 = vmatprep.subr.mxu0 0.0
    %v392 = vand.u32 %v37, 4294901760
    %v393 = vsub.f32 %v37, %v392
    %v394 = vand.u32 %v393, 4294901760
    %395 = vmatpush1.msra.mxu0 %v394
    %396 = vmatprep.subr.mxu0 0.0
    %397 = vmatpush1.msra.mxu0 0.0
    %398 = vmatprep.subr.mxu0 0.0
    %399 = vmatpush1.msra.mxu0 0.0
    %400 = vmatprep.subr.mxu0 0.0
    %401 = vmatpush1.msra.mxu0 0.0
    %402 = vmatprep.subr.mxu0 0.0
    %403 = vmatpush1.msra.mxu0 0.0
    %404 = vmatprep.subr.mxu0 0.0
    %405 = vmatpush1.msra.mxu0 0.0
    %406 = vmatprep.subr.mxu0 0.0
    %407 = vmatpush1.msra.mxu0 0.0
    %408 = vmatprep.subr.mxu0 0.0
    %409 = vmatpush1.msra.mxu0 0.0
    %410 = vmatprep.subr.mxu0 0.0
    %411 = vmatpush1.msra.mxu0 0.0
    %412 = vmatprep.subr.mxu0 0.0
    %413 = vmatpush1.msra.mxu0 0.0
    %414 = vmatprep.subr.mxu0 0.0
    %415 = vmatpush1.msra.mxu0 0.0
    %416 = vmatprep.subr.mxu0 0.0
    %417 = vmatpush1.msra.mxu0 0.0
    %418 = vmatprep.subr.mxu0 0.0
    %419 = vmatpush1.msra.mxu0 0.0
    %420 = vmatprep.subr.mxu0 0.0
    %421 = vmatpush1.msra.mxu0 0.0
    %422 = vmatprep.subr.mxu0 0.0
    %423 = vmatpush1.msra.mxu0 0.0
    %424 = vmatprep.subr.mxu0 0.0
    %425 = vmatpush1.msra.mxu0 0.0
    %426 = vmatprep.subr.mxu0 0.0
    %427 = vmatpush1.msra.mxu0 0.0
    %428 = vmatprep.subr.mxu0 0.0
    %429 = vmatpush1.msra.mxu0 0.0
    %430 = vmatprep.subr.mxu0 0.0
    %431 = vmatpush1.msra.mxu0 0.0
    %432 = vmatprep.subr.mxu0 0.0
    %433 = vmatpush1.msra.mxu0 0.0
    %434 = vmatprep.subr.mxu0 0.0
    %435 = vmatpush1.msra.mxu0 0.0
    %436 = vmatprep.subr.mxu0 0.0
    %437 = vmatpush1.msra.mxu0 0.0
    %438 = vmatprep.subr.mxu0 0.0
    %439 = vmatpush1.msra.mxu0 0.0
    %440 = vmatprep.subr.mxu0 0.0
    %441 = vmatpush1.msra.mxu0 0.0
    %442 = vmatprep.subr.mxu0 0.0
    %443 = vmatpush1.msra.mxu0 0.0
    %444 = vmatprep.subr.mxu0 0.0
    %445 = vmatpush1.msra.mxu0 0.0
    %446 = vmatprep.subr.mxu0 0.0
    %447 = vmatpush1.msra.mxu0 0.0
    %448 = vmatprep.subr.mxu0 0.0
    %449 = vmatpush1.msra.mxu0 0.0
    %450 = vmatprep.subr.mxu0 0.0
    %451 = vmatpush1.msra.mxu0 0.0
    %452 = vmatprep.mubr.f32.mxu0 0.0
    %v453 = vand.u32 %v47, 4294901760
    %454 = vmatmul.mubr.f32.gmra.mrb[0].mxu0 %v453
    %v455 = vpop.f32.mrb[0].mxu0
    %v456 = vadd.f32 %v373, %v455
    %v457 = vpop.f32.mrb[0].mxu0
    %458 = vdwg.mxu0
    %459 = vmatprep.subr.mxu0 0.0
    %v460 = vand.u32 %v34, 4294901760
    %461 = vmatpush1.msra.mxu0 %v460
    %462 = vmatprep.subr.mxu0 0.0
    %v463 = vand.u32 %v35, 4294901760
    %464 = vmatpush1.msra.mxu0 %v463
    %465 = vmatprep.subr.mxu0 0.0
    %v466 = vand.u32 %v36, 4294901760
    %467 = vmatpush1.msra.mxu0 %v466
    %468 = vmatprep.subr.mxu0 0.0
    %v469 = vand.u32 %v37, 4294901760
    %470 = vmatpush1.msra.mxu0 %v469
    %471 = vmatprep.subr.mxu0 0.0
    %472 = vmatpush1.msra.mxu0 0.0
    %473 = vmatprep.subr.mxu0 0.0
    %474 = vmatpush1.msra.mxu0 0.0
    %475 = vmatprep.subr.mxu0 0.0
    %476 = vmatpush1.msra.mxu0 0.0
    %477 = vmatprep.subr.mxu0 0.0
    %478 = vmatpush1.msra.mxu0 0.0
    %479 = vmatprep.subr.mxu0 0.0
    %480 = vmatpush1.msra.mxu0 0.0
    %481 = vmatprep.subr.mxu0 0.0
    %482 = vmatpush1.msra.mxu0 0.0
    %483 = vmatprep.subr.mxu0 0.0
    %484 = vmatpush1.msra.mxu0 0.0
    %485 = vmatprep.subr.mxu0 0.0
    %486 = vmatpush1.msra.mxu0 0.0
    %487 = vmatprep.subr.mxu0 0.0
    %488 = vmatpush1.msra.mxu0 0.0
    %489 = vmatprep.subr.mxu0 0.0
    %490 = vmatpush1.msra.mxu0 0.0
    %491 = vmatprep.subr.mxu0 0.0
    %492 = vmatpush1.msra.mxu0 0.0
    %493 = vmatprep.subr.mxu0 0.0
    %494 = vmatpush1.msra.mxu0 0.0
    %495 = vmatprep.subr.mxu0 0.0
    %496 = vmatpush1.msra.mxu0 0.0
    %497 = vmatprep.subr.mxu0 0.0
    %498 = vmatpush1.msra.mxu0 0.0
    %499 = vmatprep.subr.mxu0 0.0
    %500 = vmatpush1.msra.mxu0 0.0
    %501 = vmatprep.subr.mxu0 0.0
    %502 = vmatpush1.msra.mxu0 0.0
    %503 = vmatprep.subr.mxu0 0.0
    %504 = vmatpush1.msra.mxu0 0.0
    %505 = vmatprep.subr.mxu0 0.0
    %506 = vmatpush1.msra.mxu0 0.0
    %507 = vmatprep.subr.mxu0 0.0
    %508 = vmatpush1.msra.mxu0 0.0
    %509 = vmatprep.subr.mxu0 0.0
    %510 = vmatpush1.msra.mxu0 0.0
    %511 = vmatprep.subr.mxu0 0.0
    %512 = vmatpush1.msra.mxu0 0.0
    %513 = vmatprep.subr.mxu0 0.0
    %514 = vmatpush1.msra.mxu0 0.0
    %515 = vmatprep.subr.mxu0 0.0
    %516 = vmatpush1.msra.mxu0 0.0
    %517 = vmatprep.subr.mxu0 0.0
    %518 = vmatpush1.msra.mxu0 0.0
    %519 = vmatprep.subr.mxu0 0.0
    %520 = vmatpush1.msra.mxu0 0.0
    %521 = vmatprep.subr.mxu0 0.0
    %522 = vmatpush1.msra.mxu0 0.0
    %523 = vmatprep.subr.mxu0 0.0
    %524 = vmatpush1.msra.mxu0 0.0
    %525 = vmatprep.subr.mxu0 0.0
    %526 = vmatpush1.msra.mxu0 0.0
    %527 = vmatprep.mubr.f32.mxu0 0.0
    %v528 = vand.u32 %v47, 4294901760
    %529 = vmatmul.mubr.f32.gmra.mrb[0].mxu0 %v528
    %v530 = vpop.f32.mrb[0].mxu0
    %v531 = vadd.f32 %v456, %v530
    %v532 = vpop.f32.mrb[0].mxu0
    %533 = vdwg.mxu0
    %v534 = vmax.f32 %v531, 0.0
    %vm535 = vcmask 7168
    %536 = vst.msk [vmem:[%s5] sm:$0xff] %vm535, %v534
    %s537 = sld [smem:[#allocation2 + $0x1]]
    %v538 = vstv %s537
    %v540 = vsel %vm45, %v38, 0
    %542 = vmatprep.subr.mxu0 0.0
    %v543 = vand.u32 %v39, 4294901760
    %544 = vmatpush1.msra.mxu0 %v543
    %545 = vmatprep.subr.mxu0 0.0
    %v546 = vand.u32 %v40, 4294901760
    %547 = vmatpush1.msra.mxu0 %v546
    %548 = vmatprep.subr.mxu0 0.0
    %v549 = vand.u32 %v41, 4294901760
    %550 = vmatpush1.msra.mxu0 %v549
    %551 = vmatprep.subr.mxu0 0.0
    %v552 = vand.u32 %v42, 4294901760
    %553 = vmatpush1.msra.mxu0 %v552
    %554 = vmatprep.subr.mxu0 0.0
    %555 = vmatpush1.msra.mxu0 0.0
    %556 = vmatprep.subr.mxu0 0.0
    %557 = vmatpush1.msra.mxu0 0.0
    %558 = vmatprep.subr.mxu0 0.0
    %559 = vmatpush1.msra.mxu0 0.0
    %560 = vmatprep.subr.mxu0 0.0
    %561 = vmatpush1.msra.mxu0 0.0
    %562 = vmatprep.subr.mxu0 0.0
    %563 = vmatpush1.msra.mxu0 0.0
    %564 = vmatprep.subr.mxu0 0.0
    %565 = vmatpush1.msra.mxu0 0.0
    %566 = vmatprep.subr.mxu0 0.0
    %567 = vmatpush1.msra.mxu0 0.0
    %568 = vmatprep.subr.mxu0 0.0
    %569 = vmatpush1.msra.mxu0 0.0
    %570 = vmatprep.subr.mxu0 0.0
    %571 = vmatpush1.msra.mxu0 0.0
    %572 = vmatprep.subr.mxu0 0.0
    %573 = vmatpush1.msra.mxu0 0.0
    %574 = vmatprep.subr.mxu0 0.0
    %575 = vmatpush1.msra.mxu0 0.0
    %576 = vmatprep.subr.mxu0 0.0
    %577 = vmatpush1.msra.mxu0 0.0
    %578 = vmatprep.subr.mxu0 0.0
    %579 = vmatpush1.msra.mxu0 0.0
    %580 = vmatprep.subr.mxu0 0.0
    %581 = vmatpush1.msra.mxu0 0.0
    %582 = vmatprep.subr.mxu0 0.0
    %583 = vmatpush1.msra.mxu0 0.0
    %584 = vmatprep.subr.mxu0 0.0
    %585 = vmatpush1.msra.mxu0 0.0
    %586 = vmatprep.subr.mxu0 0.0
    %587 = vmatpush1.msra.mxu0 0.0
    %588 = vmatprep.subr.mxu0 0.0
    %589 = vmatpush1.msra.mxu0 0.0
    %590 = vmatprep.subr.mxu0 0.0
    %591 = vmatpush1.msra.mxu0 0.0
    %592 = vmatprep.subr.mxu0 0.0
    %593 = vmatpush1.msra.mxu0 0.0
    %594 = vmatprep.subr.mxu0 0.0
    %595 = vmatpush1.msra.mxu0 0.0
    %596 = vmatprep.subr.mxu0 0.0
    %597 = vmatpush1.msra.mxu0 0.0
    %598 = vmatprep.subr.mxu0 0.0
    %599 = vmatpush1.msra.mxu0 0.0
    %600 = vmatprep.subr.mxu0 0.0
    %601 = vmatpush1.msra.mxu0 0.0
    %602 = vmatprep.subr.mxu0 0.0
    %603 = vmatpush1.msra.mxu0 0.0
    %604 = vmatprep.subr.mxu0 0.0
    %605 = vmatpush1.msra.mxu0 0.0
    %606 = vmatprep.subr.mxu0 0.0
    %607 = vmatpush1.msra.mxu0 0.0
    %608 = vmatprep.subr.mxu0 0.0
    %609 = vmatpush1.msra.mxu0 0.0
    %610 = vmatprep.mubr.f32.mxu0 0.0
    %v611 = vand.u32 %v540, 4294901760
    %v612 = vsub.f32 %v540, %v611
    %v613 = vand.u32 %v612, 4294901760
    %v614 = vsub.f32 %v612, %v613
    %v615 = vand.u32 %v614, 4294901760
    %616 = vmatmul.mubr.f32.gmra.mrb[0].mxu0 %v615
    %v617 = vpop.f32.mrb[0].mxu0
    %v618 = vadd.f32 %v538, %v617
    %v619 = vpop.f32.mrb[0].mxu0
    %620 = vdwg.mxu0
    %621 = vmatprep.subr.mxu0 0.0
    %v622 = vand.u32 %v39, 4294901760
    %v623 = vsub.f32 %v39, %v622
    %v624 = vand.u32 %v623, 4294901760
    %v625 = vsub.f32 %v623, %v624
    %v626 = vand.u32 %v625, 4294901760
    %627 = vmatpush1.msra.mxu0 %v626
    %628 = vmatprep.subr.mxu0 0.0
    %v629 = vand.u32 %v40, 4294901760
    %v630 = vsub.f32 %v40, %v629
    %v631 = vand.u32 %v630, 4294901760
    %v632 = vsub.f32 %v630, %v631
    %v633 = vand.u32 %v632, 4294901760
    %634 = vmatpush1.msra.mxu0 %v633
    %635 = vmatprep.subr.mxu0 0.0
    %v636 = vand.u32 %v41, 4294901760
    %v637 = vsub.f32 %v41, %v636
    %v638 = vand.u32 %v637, 4294901760
    %v639 = vsub.f32 %v637, %v638
    %v640 = vand.u32 %v639, 4294901760
    %641 = vmatpush1.msra.mxu0 %v640
    %642 = vmatprep.subr.mxu0 0.0
    %v643 = vand.u32 %v42, 4294901760
    %v644 = vsub.f32 %v42, %v643
    %v645 = vand.u32 %v644, 4294901760
    %v646 = vsub.f32 %v644, %v645
    %v647 = vand.u32 %v646, 4294901760
    %648 = vmatpush1.msra.mxu0 %v647
    %649 = vmatprep.subr.mxu0 0.0
    %650 = vmatpush1.msra.mxu0 0.0
    %651 = vmatprep.subr.mxu0 0.0
    %652 = vmatpush1.msra.mxu0 0.0
    %653 = vmatprep.subr.mxu0 0.0
    %654 = vmatpush1.msra.mxu0 0.0
    %655 = vmatprep.subr.mxu0 0.0
    %656 = vmatpush1.msra.mxu0 0.0
    %657 = vmatprep.subr.mxu0 0.0
    %658 = vmatpush1.msra.mxu0 0.0
    %659 = vmatprep.subr.mxu0 0.0
    %660 = vmatpush1.msra.mxu0 0.0
    %661 = vmatprep.subr.mxu0 0.0
    %662 = vmatpush1.msra.mxu0 0.0
    %663 = vmatprep.subr.mxu0 0.0
    %664 = vmatpush1.msra.mxu0 0.0
    %665 = vmatprep.subr.mxu0 0.0
    %666 = vmatpush1.msra.mxu0 0.0
    %667 = vmatprep.subr.mxu0 0.0
    %668 = vmatpush1.msra.mxu0 0.0
    %669 = vmatprep.subr.mxu0 0.0
    %670 = vmatpush1.msra.mxu0 0.0
    %671 = vmatprep.subr.mxu0 0.0
    %672 = vmatpush1.msra.mxu0 0.0
    %673 = vmatprep.subr.mxu0 0.0
    %674 = vmatpush1.msra.mxu0 0.0
    %675 = vmatprep.subr.mxu0 0.0
    %676 = vmatpush1.msra.mxu0 0.0
    %677 = vmatprep.subr.mxu0 0.0
    %678 = vmatpush1.msra.mxu0 0.0
    %679 = vmatprep.subr.mxu0 0.0
    %680 = vmatpush1.msra.mxu0 0.0
    %681 = vmatprep.subr.mxu0 0.0
    %682 = vmatpush1.msra.mxu0 0.0
    %683 = vmatprep.subr.mxu0 0.0
    %684 = vmatpush1.msra.mxu0 0.0
    %685 = vmatprep.subr.mxu0 0.0
    %686 = vmatpush1.msra.mxu0 0.0
    %687 = vmatprep.subr.mxu0 0.0
    %688 = vmatpush1.msra.mxu0 0.0
    %689 = vmatprep.subr.mxu0 0.0
    %690 = vmatpush1.msra.mxu0 0.0
    %691 = vmatprep.subr.mxu0 0.0
    %692 = vmatpush1.msra.mxu0 0.0
    %693 = vmatprep.subr.mxu0 0.0
    %694 = vmatpush1.msra.mxu0 0.0
    %695 = vmatprep.subr.mxu0 0.0
    %696 = vmatpush1.msra.mxu0 0.0
    %697 = vmatprep.subr.mxu0 0.0
    %698 = vmatpush1.msra.mxu0 0.0
    %699 = vmatprep.subr.mxu0 0.0
    %700 = vmatpush1.msra.mxu0 0.0
    %701 = vmatprep.subr.mxu0 0.0
    %702 = vmatpush1.msra.mxu0 0.0
    %703 = vmatprep.subr.mxu0 0.0
    %704 = vmatpush1.msra.mxu0 0.0
    %705 = vmatprep.mubr.f32.mxu0 0.0
    %v706 = vand.u32 %v540, 4294901760
    %707 = vmatmul.mubr.f32.gmra.mrb[0].mxu0 %v706
    %v708 = vpop.f32.mrb[0].mxu0
    %v709 = vadd.f32 %v618, %v708
    %v710 = vpop.f32.mrb[0].mxu0
    %711 = vdwg.mxu0
    %712 = vmatprep.subr.mxu0 0.0
    %v713 = vand.u32 %v39, 4294901760
    %v714 = vsub.f32 %v39, %v713
    %715 = vmatpush1.msra.mxu0 %v714
    %716 = vmatprep.subr.mxu0 0.0
    %v717 = vand.u32 %v40, 4294901760
    %v718 = vsub.f32 %v40, %v717
    %719 = vmatpush1.msra.mxu0 %v718
    %720 = vmatprep.subr.mxu0 0.0
    %v721 = vand.u32 %v41, 4294901760
    %v722 = vsub.f32 %v41, %v721
    %723 = vmatpush1.msra.mxu0 %v722
    %724 = vmatprep.subr.mxu0 0.0
    %v725 = vand.u32 %v42, 4294901760
    %v726 = vsub.f32 %v42, %v725
    %727 = vmatpush1.msra.mxu0 %v726
    %728 = vmatprep.subr.mxu0 0.0
    %729 = vmatpush1.msra.mxu0 0.0
    %730 = vmatprep.subr.mxu0 0.0
    %731 = vmatpush1.msra.mxu0 0.0
    %732 = vmatprep.subr.mxu0 0.0
    %733 = vmatpush1.msra.mxu0 0.0
    %734 = vmatprep.subr.mxu0 0.0
    %735 = vmatpush1.msra.mxu0 0.0
    %736 = vmatprep.subr.mxu0 0.0
    %737 = vmatpush1.msra.mxu0 0.0
    %738 = vmatprep.subr.mxu0 0.0
    %739 = vmatpush1.msra.mxu0 0.0
    %740 = vmatprep.subr.mxu0 0.0
    %741 = vmatpush1.msra.mxu0 0.0
    %742 = vmatprep.subr.mxu0 0.0
    %743 = vmatpush1.msra.mxu0 0.0
    %744 = vmatprep.subr.mxu0 0.0
    %745 = vmatpush1.msra.mxu0 0.0
    %746 = vmatprep.subr.mxu0 0.0
    %747 = vmatpush1.msra.mxu0 0.0
    %748 = vmatprep.subr.mxu0 0.0
    %749 = vmatpush1.msra.mxu0 0.0
    %750 = vmatprep.subr.mxu0 0.0
    %751 = vmatpush1.msra.mxu0 0.0
    %752 = vmatprep.subr.mxu0 0.0
    %753 = vmatpush1.msra.mxu0 0.0
    %754 = vmatprep.subr.mxu0 0.0
    %755 = vmatpush1.msra.mxu0 0.0
    %756 = vmatprep.subr.mxu0 0.0
    %757 = vmatpush1.msra.mxu0 0.0
    %758 = vmatprep.subr.mxu0 0.0
    %759 = vmatpush1.msra.mxu0 0.0
    %760 = vmatprep.subr.mxu0 0.0
    %761 = vmatpush1.msra.mxu0 0.0
    %762 = vmatprep.subr.mxu0 0.0
    %763 = vmatpush1.msra.mxu0 0.0
    %764 = vmatprep.subr.mxu0 0.0
    %765 = vmatpush1.msra.mxu0 0.0
    %766 = vmatprep.subr.mxu0 0.0
    %767 = vmatpush1.msra.mxu0 0.0
    %768 = vmatprep.subr.mxu0 0.0
    %769 = vmatpush1.msra.mxu0 0.0
    %770 = vmatprep.subr.mxu0 0.0
    %771 = vmatpush1.msra.mxu0 0.0
    %772 = vmatprep.subr.mxu0 0.0
    %773 = vmatpush1.msra.mxu0 0.0
    %774 = vmatprep.subr.mxu0 0.0
    %775 = vmatpush1.msra.mxu0 0.0
    %776 = vmatprep.subr.mxu0 0.0
    %777 = vmatpush1.msra.mxu0 0.0
    %778 = vmatprep.subr.mxu0 0.0
    %779 = vmatpush1.msra.mxu0 0.0
    %780 = vmatprep.subr.mxu0 0.0
    %781 = vmatpush1.msra.mxu0 0.0
    %782 = vmatprep.subr.mxu0 0.0
    %783 = vmatpush1.msra.mxu0 0.0
    %784 = vmatprep.mubr.f32.mxu0 0.0
    %v785 = vand.u32 %v540, 4294901760
    %v786 = vsub.f32 %v540, %v785
    %787 = vmatmul.mubr.f32.gmra.mrb[0].mxu0 %v786
    %v788 = vpop.f32.mrb[0].mxu0
    %v789 = vadd.f32 %v709, %v788
    %v790 = vpop.f32.mrb[0].mxu0
    %791 = vdwg.mxu0
    %792 = vmatprep.subr.mxu0 0.0
    %v793 = vand.u32 %v39, 4294901760
    %794 = vmatpush1.msra.mxu0 %v793
    %795 = vmatprep.subr.mxu0 0.0
    %v796 = vand.u32 %v40, 4294901760
    %797 = vmatpush1.msra.mxu0 %v796
    %798 = vmatprep.subr.mxu0 0.0
    %v799 = vand.u32 %v41, 4294901760
    %800 = vmatpush1.msra.mxu0 %v799
    %801 = vmatprep.subr.mxu0 0.0
    %v802 = vand.u32 %v42, 4294901760
    %803 = vmatpush1.msra.mxu0 %v802
    %804 = vmatprep.subr.mxu0 0.0
    %805 = vmatpush1.msra.mxu0 0.0
    %806 = vmatprep.subr.mxu0 0.0
    %807 = vmatpush1.msra.mxu0 0.0
    %808 = vmatprep.subr.mxu0 0.0
    %809 = vmatpush1.msra.mxu0 0.0
    %810 = vmatprep.subr.mxu0 0.0
    %811 = vmatpush1.msra.mxu0 0.0
    %812 = vmatprep.subr.mxu0 0.0
    %813 = vmatpush1.msra.mxu0 0.0
    %814 = vmatprep.subr.mxu0 0.0
    %815 = vmatpush1.msra.mxu0 0.0
    %816 = vmatprep.subr.mxu0 0.0
    %817 = vmatpush1.msra.mxu0 0.0
    %818 = vmatprep.subr.mxu0 0.0
    %819 = vmatpush1.msra.mxu0 0.0
    %820 = vmatprep.subr.mxu0 0.0
    %821 = vmatpush1.msra.mxu0 0.0
    %822 = vmatprep.subr.mxu0 0.0
    %823 = vmatpush1.msra.mxu0 0.0
    %824 = vmatprep.subr.mxu0 0.0
    %825 = vmatpush1.msra.mxu0 0.0
    %826 = vmatprep.subr.mxu0 0.0
    %827 = vmatpush1.msra.mxu0 0.0
    %828 = vmatprep.subr.mxu0 0.0
    %829 = vmatpush1.msra.mxu0 0.0
    %830 = vmatprep.subr.mxu0 0.0
    %831 = vmatpush1.msra.mxu0 0.0
    %832 = vmatprep.subr.mxu0 0.0
    %833 = vmatpush1.msra.mxu0 0.0
    %834 = vmatprep.subr.mxu0 0.0
    %835 = vmatpush1.msra.mxu0 0.0
    %836 = vmatprep.subr.mxu0 0.0
    %837 = vmatpush1.msra.mxu0 0.0
    %838 = vmatprep.subr.mxu0 0.0
    %839 = vmatpush1.msra.mxu0 0.0
    %840 = vmatprep.subr.mxu0 0.0
    %841 = vmatpush1.msra.mxu0 0.0
    %842 = vmatprep.subr.mxu0 0.0
    %843 = vmatpush1.msra.mxu0 0.0
    %844 = vmatprep.subr.mxu0 0.0
    %845 = vmatpush1.msra.mxu0 0.0
    %846 = vmatprep.subr.mxu0 0.0
    %847 = vmatpush1.msra.mxu0 0.0
    %848 = vmatprep.subr.mxu0 0.0
    %849 = vmatpush1.msra.mxu0 0.0
    %850 = vmatprep.subr.mxu0 0.0
    %851 = vmatpush1.msra.mxu0 0.0
    %852 = vmatprep.subr.mxu0 0.0
    %853 = vmatpush1.msra.mxu0 0.0
    %854 = vmatprep.subr.mxu0 0.0
    %855 = vmatpush1.msra.mxu0 0.0
    %856 = vmatprep.subr.mxu0 0.0
    %857 = vmatpush1.msra.mxu0 0.0
    %858 = vmatprep.subr.mxu0 0.0
    %859 = vmatpush1.msra.mxu0 0.0
    %860 = vmatprep.mubr.f32.mxu0 0.0
    %v861 = vand.u32 %v540, 4294901760
    %v862 = vsub.f32 %v540, %v861
    %v863 = vand.u32 %v862, 4294901760
    %864 = vmatmul.mubr.f32.gmra.mrb[0].mxu0 %v863
    %v865 = vpop.f32.mrb[0].mxu0
    %v866 = vadd.f32 %v789, %v865
    %v867 = vpop.f32.mrb[0].mxu0
    %868 = vdwg.mxu0
    %869 = vmatprep.subr.mxu0 0.0
    %v870 = vand.u32 %v39, 4294901760
    %v871 = vsub.f32 %v39, %v870
    %v872 = vand.u32 %v871, 4294901760
    %873 = vmatpush1.msra.mxu0 %v872
    %874 = vmatprep.subr.mxu0 0.0
    %v875 = vand.u32 %v40, 4294901760
    %v876 = vsub.f32 %v40, %v875
    %v877 = vand.u32 %v876, 4294901760
    %878 = vmatpush1.msra.mxu0 %v877
    %879 = vmatprep.subr.mxu0 0.0
    %v880 = vand.u32 %v41, 4294901760
    %v881 = vsub.f32 %v41, %v880
    %v882 = vand.u32 %v881, 4294901760
    %883 = vmatpush1.msra.mxu0 %v882
    %884 = vmatprep.subr.mxu0 0.0
    %v885 = vand.u32 %v42, 4294901760
    %v886 = vsub.f32 %v42, %v885
    %v887 = vand.u32 %v886, 4294901760
    %888 = vmatpush1.msra.mxu0 %v887
    %889 = vmatprep.subr.mxu0 0.0
    %890 = vmatpush1.msra.mxu0 0.0
    %891 = vmatprep.subr.mxu0 0.0
    %892 = vmatpush1.msra.mxu0 0.0
    %893 = vmatprep.subr.mxu0 0.0
    %894 = vmatpush1.msra.mxu0 0.0
    %895 = vmatprep.subr.mxu0 0.0
    %896 = vmatpush1.msra.mxu0 0.0
    %897 = vmatprep.subr.mxu0 0.0
    %898 = vmatpush1.msra.mxu0 0.0
    %899 = vmatprep.subr.mxu0 0.0
    %900 = vmatpush1.msra.mxu0 0.0
    %901 = vmatprep.subr.mxu0 0.0
    %902 = vmatpush1.msra.mxu0 0.0
    %903 = vmatprep.subr.mxu0 0.0
    %904 = vmatpush1.msra.mxu0 0.0
    %905 = vmatprep.subr.mxu0 0.0
    %906 = vmatpush1.msra.mxu0 0.0
    %907 = vmatprep.subr.mxu0 0.0
    %908 = vmatpush1.msra.mxu0 0.0
    %909 = vmatprep.subr.mxu0 0.0
    %910 = vmatpush1.msra.mxu0 0.0
    %911 = vmatprep.subr.mxu0 0.0
    %912 = vmatpush1.msra.mxu0 0.0
    %913 = vmatprep.subr.mxu0 0.0
    %914 = vmatpush1.msra.mxu0 0.0
    %915 = vmatprep.subr.mxu0 0.0
    %916 = vmatpush1.msra.mxu0 0.0
    %917 = vmatprep.subr.mxu0 0.0
    %918 = vmatpush1.msra.mxu0 0.0
    %919 = vmatprep.subr.mxu0 0.0
    %920 = vmatpush1.msra.mxu0 0.0
    %921 = vmatprep.subr.mxu0 0.0
    %922 = vmatpush1.msra.mxu0 0.0
    %923 = vmatprep.subr.mxu0 0.0
    %924 = vmatpush1.msra.mxu0 0.0
    %925 = vmatprep.subr.mxu0 0.0
    %926 = vmatpush1.msra.mxu0 0.0
    %927 = vmatprep.subr.mxu0 0.0
    %928 = vmatpush1.msra.mxu0 0.0
    %929 = vmatprep.subr.mxu0 0.0
    %930 = vmatpush1.msra.mxu0 0.0
    %931 = vmatprep.subr.mxu0 0.0
    %932 = vmatpush1.msra.mxu0 0.0
    %933 = vmatprep.subr.mxu0 0.0
    %934 = vmatpush1.msra.mxu0 0.0
    %935 = vmatprep.subr.mxu0 0.0
    %936 = vmatpush1.msra.mxu0 0.0
    %937 = vmatprep.subr.mxu0 0.0
    %938 = vmatpush1.msra.mxu0 0.0
    %939 = vmatprep.subr.mxu0 0.0
    %940 = vmatpush1.msra.mxu0 0.0
    %941 = vmatprep.subr.mxu0 0.0
    %942 = vmatpush1.msra.mxu0 0.0
    %943 = vmatprep.subr.mxu0 0.0
    %944 = vmatpush1.msra.mxu0 0.0
    %945 = vmatprep.mubr.f32.mxu0 0.0
    %v946 = vand.u32 %v540, 4294901760
    %947 = vmatmul.mubr.f32.gmra.mrb[0].mxu0 %v946
    %v948 = vpop.f32.mrb[0].mxu0
    %v949 = vadd.f32 %v866, %v948
    %v950 = vpop.f32.mrb[0].mxu0
    %951 = vdwg.mxu0
    %952 = vmatprep.subr.mxu0 0.0
    %v953 = vand.u32 %v39, 4294901760
    %954 = vmatpush1.msra.mxu0 %v953
    %955 = vmatprep.subr.mxu0 0.0
    %v956 = vand.u32 %v40, 4294901760
    %957 = vmatpush1.msra.mxu0 %v956
    %958 = vmatprep.subr.mxu0 0.0
    %v959 = vand.u32 %v41, 4294901760
    %960 = vmatpush1.msra.mxu0 %v959
    %961 = vmatprep.subr.mxu0 0.0
    %v962 = vand.u32 %v42, 4294901760
    %963 = vmatpush1.msra.mxu0 %v962
    %964 = vmatprep.subr.mxu0 0.0
    %965 = vmatpush1.msra.mxu0 0.0
    %966 = vmatprep.subr.mxu0 0.0
    %967 = vmatpush1.msra.mxu0 0.0
    %968 = vmatprep.subr.mxu0 0.0
    %969 = vmatpush1.msra.mxu0 0.0
    %970 = vmatprep.subr.mxu0 0.0
    %971 = vmatpush1.msra.mxu0 0.0
    %972 = vmatprep.subr.mxu0 0.0
    %973 = vmatpush1.msra.mxu0 0.0
    %974 = vmatprep.subr.mxu0 0.0
    %975 = vmatpush1.msra.mxu0 0.0
    %976 = vmatprep.subr.mxu0 0.0
    %977 = vmatpush1.msra.mxu0 0.0
    %978 = vmatprep.subr.mxu0 0.0
    %979 = vmatpush1.msra.mxu0 0.0
    %980 = vmatprep.subr.mxu0 0.0
    %981 = vmatpush1.msra.mxu0 0.0
    %982 = vmatprep.subr.mxu0 0.0
    %983 = vmatpush1.msra.mxu0 0.0
    %984 = vmatprep.subr.mxu0 0.0
    %985 = vmatpush1.msra.mxu0 0.0
    %986 = vmatprep.subr.mxu0 0.0
    %987 = vmatpush1.msra.mxu0 0.0
    %988 = vmatprep.subr.mxu0 0.0
    %989 = vmatpush1.msra.mxu0 0.0
    %990 = vmatprep.subr.mxu0 0.0
    %991 = vmatpush1.msra.mxu0 0.0
    %992 = vmatprep.subr.mxu0 0.0
    %993 = vmatpush1.msra.mxu0 0.0
    %994 = vmatprep.subr.mxu0 0.0
    %995 = vmatpush1.msra.mxu0 0.0
    %996 = vmatprep.subr.mxu0 0.0
    %997 = vmatpush1.msra.mxu0 0.0
    %998 = vmatprep.subr.mxu0 0.0
    %999 = vmatpush1.msra.mxu0 0.0
    %1000 = vmatprep.subr.mxu0 0.0
    %1001 = vmatpush1.msra.mxu0 0.0
    %1002 = vmatprep.subr.mxu0 0.0
    %1003 = vmatpush1.msra.mxu0 0.0
    %1004 = vmatprep.subr.mxu0 0.0
    %1005 = vmatpush1.msra.mxu0 0.0
    %1006 = vmatprep.subr.mxu0 0.0
    %1007 = vmatpush1.msra.mxu0 0.0
    %1008 = vmatprep.subr.mxu0 0.0
    %1009 = vmatpush1.msra.mxu0 0.0
    %1010 = vmatprep.subr.mxu0 0.0
    %1011 = vmatpush1.msra.mxu0 0.0
    %1012 = vmatprep.subr.mxu0 0.0
    %1013 = vmatpush1.msra.mxu0 0.0
    %1014 = vmatprep.subr.mxu0 0.0
    %1015 = vmatpush1.msra.mxu0 0.0
    %1016 = vmatprep.subr.mxu0 0.0
    %1017 = vmatpush1.msra.mxu0 0.0
    %1018 = vmatprep.subr.mxu0 0.0
    %1019 = vmatpush1.msra.mxu0 0.0
    %1020 = vmatprep.mubr.f32.mxu0 0.0
    %v1021 = vand.u32 %v540, 4294901760
    %1022 = vmatmul.mubr.f32.gmra.mrb[0].mxu0 %v1021
    %v1023 = vpop.f32.mrb[0].mxu0
    %v1024 = vadd.f32 %v949, %v1023
    %v1025 = vpop.f32.mrb[0].mxu0
    %1026 = vdwg.mxu0
    %v1027 = vmax.f32 %v1024, 0.0
    %1029 = vrot.lane.b32.xlu0 %v1027, 1
    %v1030 = vpop.permute.xlu0 %1029
    %vm1032 = vcmask 15368
    %1033 = vst.msk [vmem:[%s5] sm:$0xff] %vm1032, %v1030
    // Predicated region
    $region26: #{tpu_custom_call.1} parent=1 // pred_check
      _
    $region27: #{tpu_custom_call.1} parent=1 // pred_check_branch
      %1035 = sbr.rel (0) target = $region29
    $region28: #{tpu_custom_call.1} parent=1 // pred_region
      _
    $region29: #{tpu_custom_call.1} parent=1 // pred_fallthru
      _
    // Predicated region
    $region30: #{tpu_custom_call.1} parent=1 // pred_check
      _
    $region31: #{tpu_custom_call.1} parent=1 // pred_check_branch
      %1037 = sbr.rel (0) target = $region33
    $region32: #{tpu_custom_call.1} parent=1 // pred_region
      _
    $region33: #{tpu_custom_call.1} parent=1 // pred_fallthru
      _
    %1038 = vsyncpa [#allocation3], 1

</llo_original>
